<compile_context>
chip_gen: v7x
topology: tpu7x:2x2x1
jax: 0.10.0
libtpu: 0.0.40
codegen_flags: <defaults>
</compile_context>

<pallas_src>
import functools

import jax
import jax.numpy as jnp
from jax.experimental import pallas as pl
from jax.experimental.pallas import tpu as pltpu


def _round_up(n, m):
    return ((n + m - 1) // m) * m


def _rmsnorm_kernel(x_ref, g_ref, o_ref, *, scale):
    # x_ref: (TILE_ROWS, D_pad), g_ref: (1, D_pad), o_ref: (TILE_ROWS, D_pad)
    xf = x_ref[...].astype(jnp.float32)

    # Sum of squares along lanes, accumulated in f32 (XLU reduction).
    sq_sum = jnp.sum(xf * xf, axis=-1, keepdims=True)

    # rsqrt(max(ss, 1e-24)) == 1 / max(sqrt(ss), 1e-12): matches torch
    # F.normalize's eps clamp, and the rsqrt runs on the EUP slot.
    inv = jax.lax.rsqrt(jnp.maximum(sq_sum, jnp.float32(1e-24)))

    # Fold sqrt(dim) into (gamma + 1) once on the (1, D) vector.
    gs = (g_ref[...].astype(jnp.float32) + 1.0) * jnp.float32(scale)

    o_ref[...] = ((xf * inv) * gs).astype(o_ref.dtype)


def rmsnorm(x, gamma, *, tile_rows=None, vmem_limit_bytes=48 * 1024 * 1024):
    """x: (..., D), gamma: (D,). Returns same shape/dtype as x."""
    orig_shape = x.shape
    d = orig_shape[-1]
    out_dtype = x.dtype

    x2 = x.reshape(-1, d)
    n_rows = x2.shape[0]

    # Lane-dense feature axis: pad D up to a multiple of 128.
    d_pad = _round_up(d, 128)

    # Sublane packing for the row tile: 8 for 4-byte, 16 for bf16, 32 for 1B.
    in_bytes = jnp.dtype(x.dtype).itemsize
    out_bytes = jnp.dtype(out_dtype).itemsize
    sublane = max(8, 32 // max(in_bytes, 1))

    if tile_rows is None:
        # Per-step VMEM footprint ~= 2x double-buffered (in + out) tiles plus
        # f32 intermediates (~8 B/element). Budget ~20 MiB so the tile fits
        # comfortably on v7x (64 MiB physical VMEM) as well as v5e/v6e.
        bytes_per_row = d_pad * (2 * in_bytes + 2 * out_bytes + 8)
        budget = 20 * 1024 * 1024
        tile_rows = max(sublane, budget // max(bytes_per_row, 1))
        tile_rows = min(tile_rows, 1024)

    # Never tile bigger than the (sublane-rounded) problem, and keep the tile
    # a multiple of the sublane packing so stores stay unmasked.
    tile_rows = min(int(tile_rows), _round_up(n_rows, sublane))
    tile_rows = max(sublane, (tile_rows // sublane) * sublane)

    rows_pad = _round_up(n_rows, tile_rows)

    # Pad rows / features with zeros (sliced off below).
    if rows_pad != n_rows or d_pad != d:
        x2 = jnp.pad(x2, ((0, rows_pad - n_rows), (0, d_pad - d)))
    gamma2 = gamma.reshape(1, d)
    if d_pad != d:
        gamma2 = jnp.pad(gamma2, ((0, 0), (0, d_pad - d)))

    grid = (rows_pad // tile_rows,)
    kernel = functools.partial(_rmsnorm_kernel, scale=float(d) ** 0.5)

    out = pl.pallas_call(
        kernel,
        out_shape=jax.ShapeDtypeStruct((rows_pad, d_pad), out_dtype),
        grid_spec=pltpu.PrefetchScalarGridSpec(
            num_scalar_prefetch=0,
            grid=grid,
            in_specs=[
                pl.BlockSpec((tile_rows, d_pad), lambda i: (i, 0)),
                pl.BlockSpec((1, d_pad), lambda i: (0, 0)),
            ],
            out_specs=pl.BlockSpec((tile_rows, d_pad), lambda i: (i, 0)),
        ),
        compiler_params=pltpu.CompilerParams(
            # Single row axis shards across TensorCores on v7x megacore.
            dimension_semantics=("parallel",),
            vmem_limit_bytes=vmem_limit_bytes,
        ),
    )(x2, gamma2)

    if rows_pad != n_rows or d_pad != d:
        out = out[:n_rows, :d]
    return out.reshape(orig_shape)


if __name__ == "__main__":
    key = jax.random.PRNGKey(0)
    B, S, D = 2, 8, 32  # batch, seq, hidden

    kx, kg = jax.random.split(key)
    x = jax.random.normal(kx, (B, S, D), dtype=jnp.float32)
    # Module initializes gamma = zeros(dim); use small deterministic values to
    # exercise the (gamma + 1) path as well.
    gamma = 0.1 * jax.random.normal(kg, (D,), dtype=jnp.float32)

    out = rmsnorm(x, gamma)
    out = jax.block_until_ready(out)

    # Reference in plain JAX for sanity check.
    l2 = jnp.sqrt(jnp.sum(x * x, axis=-1, keepdims=True))
    ref = x / jnp.maximum(l2, 1e-12) * (D ** 0.5) * (gamma + 1.0)
    assert out.shape == x.shape and out.dtype == x.dtype
    assert jnp.allclose(out, ref, atol=1e-5, rtol=1e-5), "mismatch vs reference"

    print("KERNEL_OK")
</pallas_src>

<mosaic_0001>
module attributes {stable_mosaic.version = 11 : i64} {
  func.func @_rmsnorm_kernel(%arg0: i32, %arg1: memref<16x128xf32, #tpu.memory_space<vmem>>, %arg2: memref<1x128xf32, #tpu.memory_space<vmem>>, %arg3: memref<16x128xf32, #tpu.memory_space<vmem>>) attributes {dimension_semantics = [#tpu.dimension_semantics<parallel>], iteration_bounds = array<i64: 1>, scalar_prefetch = 0 : i64, scratch_operands = 0 : i64, tpu.core_type = #tpu.core_type<tc>, window_params = [{transform_indices = @transform_0, window_bounds = array<i64: 16, 128>}, {pipeline_mode = #tpu.pipeline_mode<synchronous>, transform_indices = @transform_1, window_bounds = array<i64: 1, 128>}, {transform_indices = @transform_2, window_bounds = array<i64: 16, 128>}]} {
    %c0 = arith.constant 0 : index
    %c0_0 = arith.constant 0 : index
    %0 = vector.load %arg1[%c0, %c0_0] : memref<16x128xf32, #tpu.memory_space<vmem>>, vector<16x128xf32>
    %1 = arith.mulf %0, %0 : vector<16x128xf32>
    %cst = arith.constant dense<0.000000e+00> : vector<16xf32>
    %2 = vector.multi_reduction <add>, %1, %cst [1] : vector<16x128xf32> to vector<16xf32>
    %3 = vector.shape_cast %2 : vector<16xf32> to vector<16x1xf32>
    %cst_1 = arith.constant 1.000000e-24 : f32
    %4 = vector.broadcast %cst_1 : f32 to vector<16x1xf32>
    %5 = arith.maximumf %3, %4 : vector<16x1xf32>
    %6 = math.rsqrt %5 : vector<16x1xf32>
    %c0_2 = arith.constant 0 : index
    %c0_3 = arith.constant 0 : index
    %7 = vector.load %arg2[%c0_2, %c0_3] : memref<1x128xf32, #tpu.memory_space<vmem>>, vector<1x128xf32>
    %cst_4 = arith.constant 1.000000e+00 : f32
    %8 = vector.broadcast %cst_4 : f32 to vector<1x128xf32>
    %9 = arith.addf %7, %8 : vector<1x128xf32>
    %cst_5 = arith.constant 5.65685415 : f32
    %10 = vector.broadcast %cst_5 : f32 to vector<1x128xf32>
    %11 = arith.mulf %9, %10 : vector<1x128xf32>
    %12 = vector.broadcast %6 : vector<16x1xf32> to vector<16x128xf32>
    %13 = arith.mulf %0, %12 : vector<16x128xf32>
    %14 = vector.broadcast %11 : vector<1x128xf32> to vector<16x128xf32>
    %15 = arith.mulf %13, %14 : vector<16x128xf32>
    %c0_6 = arith.constant 0 : index
    %c0_7 = arith.constant 0 : index
    %16 = vector.load %arg3[%c0_6, %c0_7] : memref<16x128xf32, #tpu.memory_space<vmem>>, vector<16x128xf32>
    tpu.vector_store %arg3[%c0_6, %c0_7], %15 {strides = array<i32>} : memref<16x128xf32, #tpu.memory_space<vmem>>, vector<16x128xf32>,
    return
  }
  func.func @transform_0(%arg0: i32) -> (i32, i32) {
    %c0_i32 = arith.constant 0 : i32
    %c0_i32_0 = arith.constant 0 : i32
    return %arg0, %c0_i32 : i32, i32
  }
  func.func @transform_1(%arg0: i32) -> (i32, i32) {
    %c0_i32 = arith.constant 0 : i32
    %c0_i32_0 = arith.constant 0 : i32
    %c0_i32_1 = arith.constant 0 : i32
    return %c0_i32, %c0_i32_0 : i32, i32
  }
  func.func @transform_2(%arg0: i32) -> (i32, i32) {
    %c0_i32 = arith.constant 0 : i32
    %c0_i32_0 = arith.constant 0 : i32
    return %arg0, %c0_i32 : i32, i32
  }
}

</mosaic_0001>

<llo_original>
// kernel: tpu_custom_call.1
$region0: #{tpu_custom_call.1}
  #allocation0 [shape = 'u32[]', space=smem, size = 0x4, offset = 0x4, fixed_abs, tag = 'smem constant byte address 0x4 - core index']
  #allocation1 [shape = 'u32[144,128]{1,0:T(1,128)}', space=vmem, size = 0x12000, scoped, tag = 'internal scratch']
  %s0 = inlined_call_operand.hbm [shape: f32[16,128], index: 0, kind: input, shape index: {}]
  %s1 = inlined_call_operand.vmem [shape: f32[1,128], index: 1, kind: input, shape index: {}]
  %s2 = inlined_call_operand.hbm [shape: f32[16,128], index: 2, kind: output, shape index: {}]
  %s3 = sld [smem:[#allocation0]]
  $region22: #{tpu_custom_call.1} parent=0
    _
  %s5 = ssub.s32 1, %s3
  %s6 = scalar_select 0, %s5, %s3
  $region1: #{tpu_custom_call.1} parent=0
    #allocation2 [shape = 'u8[8192]{0}', space=vmem, size = 0x2000, scoped, tag = 'input window, operand 0, single buffered']
    #allocation3 [shape = 's32[1]{0}', space=sflag, size = 0x4, scoped, tag = 'scoped memory for tpu_custom_call.1']
    #allocation4 [shape = 's32[1]{0}', space=sflag, size = 0x4, scoped, tag = 'scoped memory for tpu_custom_call.1']
    #allocation5 [shape = 'u8[8192]{0}', space=vmem, size = 0x2000, scoped, tag = 'output window, operand 0, single buffered']
    %7 = vsyncpa [#allocation3], 0
    %8 = vsyncpa [#allocation4], 0
    // Predicated region
    $region2: #{tpu_custom_call.1} parent=1 // pred_check
      _
    $region3: #{tpu_custom_call.1} parent=1 // pred_check_branch
      %10 = sbr.rel (0) target = $region5
    $region4: #{tpu_custom_call.1} parent=1 // pred_region
      %s12 = ssub.s32 256, 256
      %13 = vsyncadd [#allocation3], %s12
      %s14 = sshll.u32 [#allocation2], 4
      %s15 = int_to_ptr.vmem [resolvable:$true] %s14
      %20 = dma.hbm_to_vmem [thread:$0]  %s0, 256, %s15, [#allocation3], 128, 128, 8
    $region5: #{tpu_custom_call.1} parent=1 // pred_fallthru
      _
    // Predicated region
    $region6: #{tpu_custom_call.1} parent=1 // pred_check
      _
    $region7: #{tpu_custom_call.1} parent=1 // pred_check_branch
      %22 = sbr.rel (0) target = $region9
    $region8: #{tpu_custom_call.1} parent=1 // pred_region
      _
    $region9: #{tpu_custom_call.1} parent=1 // pred_fallthru
      _
    // Predicated region
    $region10: #{tpu_custom_call.1} parent=1 // pred_check
      _
    $region11: #{tpu_custom_call.1} parent=1 // pred_check_branch
      %24 = sbr.rel (0) target = $region13
    $region12: #{tpu_custom_call.1} parent=1 // pred_region
      %25 = dma.done [#allocation3], 256
    $region13: #{tpu_custom_call.1} parent=1 // pred_fallthru
      _
    %v26 = vld [vmem:[#allocation2] sm:$0xff]
    %v27 = vld [vmem:[#allocation2 + $0x8] sm:$0xff]
    %v28 = vmul.f32 %v26, %v26
    %v29 = vmul.f32 %v27, %v27
    %30 = vadd.xlane.f32.xlu0 %v28
    %v31 = vpop.xlane.xlu0 %30
    %32 = vadd.xlane.f32.xlu0 %v29
    %v33 = vpop.xlane.xlu0 %32
    %v34 = vmax.f32 %v31, 1e-24
    %v35 = vmax.f32 %v33, 1e-24
    %v36 = vrsqrt.pop %v34
    %v37 = vrsqrt.pop %v35
    %v38 = vld [vmem:[%s1] sm:$0x1]
    %v39 = vadd.f32 %v38, 1.0
    %v40 = vmul.f32 %v39, 5.656854
    %v41 = vmul.f32 %v26, %v36
    %v42 = vmul.f32 %v27, %v37
    %v44 = vlaneseq
    %v45 = vshrl.u32 %v44, 7
    %v46 = vsub.s32 0, %v45
    %v47 = vrot.slane %v40, %v46
    %v49 = vmul.f32 %v41, %v47
    %v50 = vmul.f32 %v42, %v47
    %51 = vst [vmem:[#allocation5] sm:$0xff] %v49
    %52 = vst [vmem:[#allocation5 + $0x8] sm:$0xff] %v50
    // Predicated region
    $region14: #{tpu_custom_call.1} parent=1 // pred_check
      _
    $region15: #{tpu_custom_call.1} parent=1 // pred_check_branch
      %54 = sbr.rel (0) target = $region17
    $region16: #{tpu_custom_call.1} parent=1 // pred_region
      %s56 = ssub.s32 256, 256
      %57 = vsyncadd [#allocation4], %s56
      %s58 = sshll.u32 [#allocation5], 4
      %s59 = int_to_ptr.vmem [resolvable:$true] %s58
      %64 = dma.vmem_to_hbm [thread:$0]  %s59, 256, %s2, [#allocation4], 128, 128, 8
    $region17: #{tpu_custom_call.1} parent=1 // pred_fallthru
      _
    // Predicated region
    $region18: #{tpu_custom_call.1} parent=1 // pred_check
      _
    $region19: #{tpu_custom_call.1} parent=1 // pred_check_branch
      %66 = sbr.rel (0) target = $region21
    $region20: #{tpu_custom_call.1} parent=1 // pred_region
      %67 = dma.done [#allocation4], 256
    $region21: #{tpu_custom_call.1} parent=1 // pred_fallthru
      _
    %68 = vsyncpa [#allocation3], 1
    %69 = vsyncpa [#allocation4], 1

</llo_original>
